<compile_context>
chip_gen: v6e
topology: v6e:2x2x1
jax: 0.10.0
libtpu: 0.0.40
codegen_flags: <defaults>
</compile_context>

<pallas_src>
import jax
import jax.numpy as jnp
from jax import lax
from jax.experimental import pallas as pl
from jax.experimental.pallas import tpu as pltpu

N_X = 2            # RLC state dim (v_C, i_L)
N_U = 1            # input dim
N_FEAT = 64        # hidden width of f
LANES = 128        # TPU lane width (state-carry scratch width)
OUT_W = 8          # output lane width (only lane 0 = x0 is consumed)
GROUP = 8          # inner static unroll (steps per group)
_MAX_T_BLK = 2048  # max rows per time chunk (VMEM-safe on all generations)


def _round_up(n, m):
    return ((n + m - 1) // m) * m


def _make_kernel(t_blk):
    n_groups = t_blk // GROUP  # static

    def kernel(u_ref, w1_ref, w2_ref, w1u_ref, b1_ref, b2_ref, out_ref, x_state):
        """One time chunk of the serial forward-Euler recurrence (VPU/XLU only).

        Per step:
          h   = ReLU(x0*W1[0,:] + x1*W1[1,:] + (u_t*W1u + b1))
          dx0 = sum(h * W2[:,0]) + b2[0]
          dx1 = sum(h * W2[:,1]) + b2[1]
          x  += dx                         (x_k recorded BEFORE the update)
        """
        # x_0 = zeros at the very first grid step; afterwards the state is
        # carried across time chunks in the persistent VMEM scratch.
        @pl.when(pl.program_id(0) == 0)
        def _():
            x_state[...] = jnp.zeros_like(x_state)

        # Loop-invariant weights: hoisted once per chunk, live in vregs.
        w1r0 = w1_ref[0:1, :]          # (1,64)  W1 row for x0
        w1r1 = w1_ref[1:2, :]          # (1,64)  W1 row for x1
        w2c0 = w2_ref[0:1, :]          # (1,64)  W2 column 0
        w2c1 = w2_ref[1:2, :]          # (1,64)  W2 column 1
        w1u = w1u_ref[...]             # (1,64)  W1 row for u
        b1 = b1_ref[...]               # (1,64)
        b20 = b2_ref[0]                # scalar (SMEM)
        b21 = b2_ref[1]

        lane = lax.broadcasted_iota(jnp.int32, (1, LANES), 1)

        # Unpack carried state (lane 0 = x0, lane 1 = x1) into (1,1) values.
        row = x_state[...]                                              # (1,128)
        x0 = jnp.sum(jnp.where(lane == 0, row, 0.0), axis=-1, keepdims=True)
        x1 = jnp.sum(jnp.where(lane == 1, row, 0.0), axis=-1, keepdims=True)

        def group_body(g, carry):
            x0, x1 = carry
            t0 = pl.multiple_of(g * GROUP, GROUP)
            # One aligned (GROUP,1) u load; in-kernel layer-1 bias for the
            # whole group.  Entirely off the serial dependency chain.
            u_tile = u_ref[pl.ds(t0, GROUP), :]            # (8, 1)
            bias_tile = u_tile * w1u + b1                  # (8, 64)
            for j in range(GROUP):                         # static unroll by 8
                bias_t = bias_tile[j:j + 1, :]             # static sublane slice
                # Record x0 (pre-update) -- off the serial chain; only x0 is
                # consumed downstream (y_out = x_sim[:, [0]]).
                out_ref[pl.ds(t0 + j, 1), :] = jnp.broadcast_to(x0, (1, OUT_W))
                h = jnp.maximum(x0 * w1r0 + x1 * w1r1 + bias_t, 0.0)   # VPU
                dx0 = jnp.sum(h * w2c0, axis=-1, keepdims=True) + b20  # XLU
                dx1 = jnp.sum(h * w2c1, axis=-1, keepdims=True) + b21  # XLU (parallel)
                x0 = x0 + dx0
                x1 = x1 + dx1
            return x0, x1

        x0, x1 = lax.fori_loop(0, n_groups, group_body, (x0, x1))

        # Persist the state for the next time chunk.
        x_state[...] = (jnp.where(lane == 0, x0, 0.0)
                        + jnp.where(lane == 1, x1, 0.0))

    return kernel


def state_space_wrapper_forward(u_in, params):
    """y_out = StateSpaceWrapper(model)(u_in); u_in: (T, 1) f32 -> (T, 1) f32."""
    T = u_in.shape[0]
    u = u_in.astype(jnp.float32)

    w1x = params["w1x"].astype(jnp.float32)               # (2, 64)
    w1u = params["w1u"].astype(jnp.float32)[None, :]       # (1, 64)
    b1 = params["b1"].astype(jnp.float32)[None, :]         # (1, 64)
    w2t = params["w2"].astype(jnp.float32).T               # (2, 64)  rows = W2 cols
    b2 = params["b2"].astype(jnp.float32)                  # (2,)

    # Balanced time chunks: t_blk = round_up(cdiv(T, n_chunks), GROUP), so the
    # padded (wasted serial) steps are bounded by ~GROUP per chunk -- no
    # dynamic trip counts needed, even for large T.
    n_chunks = max(1, pl.cdiv(T, _MAX_T_BLK))
    t_blk = _round_up(pl.cdiv(T, n_chunks), GROUP)
    t_pad = n_chunks * t_blk
    if t_pad != T:
        u = jnp.pad(u, ((0, t_pad - T), (0, 0)))

    xsim = pl.pallas_call(
        _make_kernel(t_blk),
        out_shape=jax.ShapeDtypeStruct((t_pad, OUT_W), jnp.float32),
        grid=(n_chunks,),
        in_specs=[
            pl.BlockSpec((t_blk, N_U), lambda i: (i, 0)),        # u stream (thin)
            pl.BlockSpec((N_X, N_FEAT), lambda i: (0, 0)),       # W1 x-rows (packed)
            pl.BlockSpec((N_X, N_FEAT), lambda i: (0, 0)),       # W2^T rows (packed)
            pl.BlockSpec((1, N_FEAT), lambda i: (0, 0)),         # W1 u-row
            pl.BlockSpec((1, N_FEAT), lambda i: (0, 0)),         # b1
            pl.BlockSpec(memory_space=pltpu.MemorySpace.SMEM),   # b2 scalars
        ],
        out_specs=pl.BlockSpec((t_blk, OUT_W), lambda i: (i, 0)),
        scratch_shapes=[pltpu.VMEM((1, LANES), jnp.float32)],    # carried state
        compiler_params=pltpu.CompilerParams(
            dimension_semantics=("arbitrary",)),                 # serial carry
    )(u, w1x, w2t, w1u, b1, b2)

    return xsim[:T, :1]                                   # x_sim[:, [0]] -> (T, 1)


def _init_params(key):
    """Deterministic PyTorch-Linear-style init for f: Linear(3,64)+ReLU+Linear(64,2)."""
    k1, k2, k3, k4 = jax.random.split(key, 4)
    fan1 = N_X + N_U
    bound1 = 1.0 / jnp.sqrt(fan1)
    w1 = jax.random.uniform(k1, (fan1, N_FEAT), jnp.float32, -bound1, bound1)
    b1 = jax.random.uniform(k2, (N_FEAT,), jnp.float32, -bound1, bound1)
    bound2 = 1.0 / jnp.sqrt(N_FEAT)
    w2 = jax.random.uniform(k3, (N_FEAT, N_X), jnp.float32, -bound2, bound2)
    b2 = jax.random.uniform(k4, (N_X,), jnp.float32, -bound2, bound2)
    return {
        "w1x": w1[:N_X, :],          # (2, 64) x-part of first Linear
        "w1u": w1[N_X, :],           # (64,)   u-part of first Linear
        "b1": b1,                    # (64,)
        "w2": w2,                    # (64, 2)
        "b2": b2,                    # (2,)
    }


def _reference_forward(u_in, params):
    """Pure-JAX reference of the wrapped model (for correctness check)."""
    u_flat = u_in[:, 0].astype(jnp.float32)

    def scan_step(x, u_t):
        h = jnp.maximum(x @ params["w1x"] + u_t * params["w1u"] + params["b1"], 0.0)
        dx = h @ params["w2"] + params["b2"]
        return x + dx, x               # emit state BEFORE update (matches simulator)

    _, x_sim = lax.scan(scan_step, jnp.zeros((N_X,), jnp.float32), u_flat)
    return x_sim[:, :1]


if __name__ == "__main__":
    key = jax.random.PRNGKey(0)
    k_param, k_u = jax.random.split(key)
    params = _init_params(k_param)

    T = 8                                                   # seq length
    u_in = jax.random.normal(k_u, (T, N_U), jnp.float32)    # u_in: (8, 1)

    fwd = jax.jit(state_space_wrapper_forward)
    y_out = jax.block_until_ready(fwd(u_in, params))
    y_ref = jax.block_until_ready(_reference_forward(u_in, params))

    assert y_out.shape == (T, 1), y_out.shape
    assert jnp.allclose(y_out, y_ref, atol=1e-4, rtol=1e-4), (y_out, y_ref)
    print("KERNEL_OK")
</pallas_src>

<mosaic_0001>
module attributes {stable_mosaic.version = 11 : i64} {
  func.func @kernel(%arg0: i32, %arg1: memref<8x1xf32, #tpu.memory_space<vmem>>, %arg2: memref<2x64xf32, #tpu.memory_space<vmem>>, %arg3: memref<2x64xf32, #tpu.memory_space<vmem>>, %arg4: memref<1x64xf32, #tpu.memory_space<vmem>>, %arg5: memref<1x64xf32, #tpu.memory_space<vmem>>, %arg6: memref<2xf32, #tpu.memory_space<smem>>, %arg7: memref<8x8xf32, #tpu.memory_space<vmem>>, %arg8: memref<1x128xf32, #tpu.memory_space<vmem>>) attributes {dimension_semantics = [#tpu.dimension_semantics<arbitrary>], iteration_bounds = array<i64: 1>, scalar_prefetch = 0 : i64, scratch_operands = 1 : i64, tpu.core_type = #tpu.core_type<tc>, window_params = [{transform_indices = @transform_0, window_bounds = array<i64: 8, 1>}, {pipeline_mode = #tpu.pipeline_mode<synchronous>, transform_indices = @transform_1, window_bounds = array<i64: 2, 64>}, {pipeline_mode = #tpu.pipeline_mode<synchronous>, transform_indices = @transform_2, window_bounds = array<i64: 2, 64>}, {pipeline_mode = #tpu.pipeline_mode<synchronous>, transform_indices = @transform_3, window_bounds = array<i64: 1, 64>}, {pipeline_mode = #tpu.pipeline_mode<synchronous>, transform_indices = @transform_4, window_bounds = array<i64: 1, 64>}, {transform_indices = @transform_5, window_bounds = array<i64: 2>}, {transform_indices = @transform_6, window_bounds = array<i64: 8, 8>}]} {
    %c0_i32 = arith.constant 0 : i32
    %0 = arith.cmpi eq, %arg0, %c0_i32 : i32
    %1 = arith.extui %0 : i1 to i32
    %c0_i32_0 = arith.constant 0 : i32
    %2 = arith.cmpi ne, %1, %c0_i32_0 : i32
    scf.if %2 {
      %cst_62 = arith.constant 0.000000e+00 : f32
      %256 = vector.broadcast %cst_62 : f32 to vector<1x128xf32>
      %c0_63 = arith.constant 0 : index
      %c0_64 = arith.constant 0 : index
      %257 = vector.load %arg8[%c0_63, %c0_64] : memref<1x128xf32, #tpu.memory_space<vmem>>, vector<1x128xf32>
      tpu.vector_store %arg8[%c0_63, %c0_64], %256 {strides = array<i32>} : memref<1x128xf32, #tpu.memory_space<vmem>>, vector<1x128xf32>,
    } else {
    }
    %c0 = arith.constant 0 : index
    %c0_1 = arith.constant 0 : index
    %3 = vector.load %arg2[%c0, %c0_1] : memref<2x64xf32, #tpu.memory_space<vmem>>, vector<1x64xf32>
    %c1 = arith.constant 1 : index
    %c0_2 = arith.constant 0 : index
    %4 = vector.load %arg2[%c1, %c0_2] : memref<2x64xf32, #tpu.memory_space<vmem>>, vector<1x64xf32>
    %c0_3 = arith.constant 0 : index
    %c0_4 = arith.constant 0 : index
    %5 = vector.load %arg3[%c0_3, %c0_4] : memref<2x64xf32, #tpu.memory_space<vmem>>, vector<1x64xf32>
    %c1_5 = arith.constant 1 : index
    %c0_6 = arith.constant 0 : index
    %6 = vector.load %arg3[%c1_5, %c0_6] : memref<2x64xf32, #tpu.memory_space<vmem>>, vector<1x64xf32>
    %c0_7 = arith.constant 0 : index
    %c0_8 = arith.constant 0 : index
    %7 = vector.load %arg4[%c0_7, %c0_8] : memref<1x64xf32, #tpu.memory_space<vmem>>, vector<1x64xf32>
    %c0_9 = arith.constant 0 : index
    %c0_10 = arith.constant 0 : index
    %8 = vector.load %arg5[%c0_9, %c0_10] : memref<1x64xf32, #tpu.memory_space<vmem>>, vector<1x64xf32>
    %c0_11 = arith.constant 0 : index
    %9 = memref.load %arg6[%c0_11] : memref<2xf32, #tpu.memory_space<smem>>
    %c1_12 = arith.constant 1 : index
    %10 = memref.load %arg6[%c1_12] : memref<2xf32, #tpu.memory_space<smem>>
    %11 = tpu.iota {dimensions = array<i32: 1>} : vector<1x128xi32>
    %c0_13 = arith.constant 0 : index
    %c0_14 = arith.constant 0 : index
    %12 = vector.load %arg8[%c0_13, %c0_14] : memref<1x128xf32, #tpu.memory_space<vmem>>, vector<1x128xf32>
    %c0_i32_15 = arith.constant 0 : i32
    %13 = vector.broadcast %c0_i32_15 : i32 to vector<1x128xi32>
    %14 = arith.cmpi eq, %11, %13 : vector<1x128xi32>
    %cst = arith.constant 0.000000e+00 : f32
    %15 = vector.broadcast %cst : f32 to vector<1x128xf32>
    %16 = arith.select %14, %12, %15 : vector<1x128xi1>, vector<1x128xf32>
    %cst_16 = arith.constant dense<0.000000e+00> : vector<1xf32>
    %17 = vector.multi_reduction <add>, %16, %cst_16 [1] : vector<1x128xf32> to vector<1xf32>
    %18 = vector.shape_cast %17 : vector<1xf32> to vector<1x1xf32>
    %c1_i32 = arith.constant 1 : i32
    %19 = vector.broadcast %c1_i32 : i32 to vector<1x128xi32>
    %20 = arith.cmpi eq, %11, %19 : vector<1x128xi32>
    %cst_17 = arith.constant 0.000000e+00 : f32
    %21 = vector.broadcast %cst_17 : f32 to vector<1x128xf32>
    %22 = arith.select %20, %12, %21 : vector<1x128xi1>, vector<1x128xf32>
    %cst_18 = arith.constant dense<0.000000e+00> : vector<1xf32>
    %23 = vector.multi_reduction <add>, %22, %cst_18 [1] : vector<1x128xf32> to vector<1xf32>
    %24 = vector.shape_cast %23 : vector<1xf32> to vector<1x1xf32>
    %c0_i32_19 = arith.constant 0 : i32
    %c8_i32 = arith.constant 8 : i32
    %25 = arith.muli %c0_i32_19, %c8_i32 : i32
    %26 = tpu.assume_multiple %25, 8 : i32
    %27 = arith.index_cast %26 : i32 to index
    %c0_20 = arith.constant 0 : index
    %28 = vector.load %arg1[%27, %c0_20] : memref<8x1xf32, #tpu.memory_space<vmem>>, vector<8x1xf32>
    %29 = vector.broadcast %28 : vector<8x1xf32> to vector<8x64xf32>
    %30 = vector.broadcast %7 : vector<1x64xf32> to vector<8x64xf32>
    %31 = arith.mulf %29, %30 : vector<8x64xf32>
    %32 = vector.broadcast %8 : vector<1x64xf32> to vector<8x64xf32>
    %33 = arith.addf %31, %32 : vector<8x64xf32>
    %34 = vector.extract_strided_slice %33 {offsets = [0, 0], sizes = [1, 64], strides = [1, 1]} : vector<8x64xf32> to vector<1x64xf32>
    %35 = vector.shape_cast %18 : vector<1x1xf32> to vector<1x1xf32>
    %36 = vector.broadcast %35 : vector<1x1xf32> to vector<1x8xf32>
    %c0_i32_21 = arith.constant 0 : i32
    %37 = arith.addi %26, %c0_i32_21 : i32
    %38 = arith.index_cast %37 : i32 to index
    %c0_22 = arith.constant 0 : index
    %39 = vector.load %arg7[%38, %c0_22] : memref<8x8xf32, #tpu.memory_space<vmem>>, vector<1x8xf32>
    tpu.vector_store %arg7[%38, %c0_22], %36 {strides = array<i32>} : memref<8x8xf32, #tpu.memory_space<vmem>>, vector<1x8xf32>,
    %40 = vector.broadcast %18 : vector<1x1xf32> to vector<1x64xf32>
    %41 = arith.mulf %40, %3 : vector<1x64xf32>
    %42 = vector.broadcast %24 : vector<1x1xf32> to vector<1x64xf32>
    %43 = arith.mulf %42, %4 : vector<1x64xf32>
    %44 = arith.addf %41, %43 : vector<1x64xf32>
    %45 = arith.addf %44, %34 : vector<1x64xf32>
    %cst_23 = arith.constant 0.000000e+00 : f32
    %46 = vector.broadcast %cst_23 : f32 to vector<1x64xf32>
    %47 = arith.maximumf %45, %46 : vector<1x64xf32>
    %48 = arith.mulf %47, %5 : vector<1x64xf32>
    %cst_24 = arith.constant dense<0.000000e+00> : vector<1xf32>
    %49 = vector.multi_reduction <add>, %48, %cst_24 [1] : vector<1x64xf32> to vector<1xf32>
    %50 = vector.shape_cast %49 : vector<1xf32> to vector<1x1xf32>
    %51 = vector.broadcast %9 : f32 to vector<1x1xf32>
    %52 = arith.addf %50, %51 : vector<1x1xf32>
    %53 = arith.mulf %47, %6 : vector<1x64xf32>
    %cst_25 = arith.constant dense<0.000000e+00> : vector<1xf32>
    %54 = vector.multi_reduction <add>, %53, %cst_25 [1] : vector<1x64xf32> to vector<1xf32>
    %55 = vector.shape_cast %54 : vector<1xf32> to vector<1x1xf32>
    %56 = vector.broadcast %10 : f32 to vector<1x1xf32>
    %57 = arith.addf %55, %56 : vector<1x1xf32>
    %58 = arith.addf %18, %52 : vector<1x1xf32>
    %59 = arith.addf %24, %57 : vector<1x1xf32>
    %60 = vector.extract_strided_slice %33 {offsets = [1, 0], sizes = [1, 64], strides = [1, 1]} : vector<8x64xf32> to vector<1x64xf32>
    %61 = vector.shape_cast %58 : vector<1x1xf32> to vector<1x1xf32>
    %62 = vector.broadcast %61 : vector<1x1xf32> to vector<1x8xf32>
    %c1_i32_26 = arith.constant 1 : i32
    %63 = arith.addi %26, %c1_i32_26 : i32
    %64 = arith.index_cast %63 : i32 to index
    %c0_27 = arith.constant 0 : index
    %65 = vector.load %arg7[%64, %c0_27] : memref<8x8xf32, #tpu.memory_space<vmem>>, vector<1x8xf32>
    tpu.vector_store %arg7[%64, %c0_27], %62 {strides = array<i32>} : memref<8x8xf32, #tpu.memory_space<vmem>>, vector<1x8xf32>,
    %66 = vector.broadcast %58 : vector<1x1xf32> to vector<1x64xf32>
    %67 = arith.mulf %66, %3 : vector<1x64xf32>
    %68 = vector.broadcast %59 : vector<1x1xf32> to vector<1x64xf32>
    %69 = arith.mulf %68, %4 : vector<1x64xf32>
    %70 = arith.addf %67, %69 : vector<1x64xf32>
    %71 = arith.addf %70, %60 : vector<1x64xf32>
    %cst_28 = arith.constant 0.000000e+00 : f32
    %72 = vector.broadcast %cst_28 : f32 to vector<1x64xf32>
    %73 = arith.maximumf %71, %72 : vector<1x64xf32>
    %74 = arith.mulf %73, %5 : vector<1x64xf32>
    %cst_29 = arith.constant dense<0.000000e+00> : vector<1xf32>
    %75 = vector.multi_reduction <add>, %74, %cst_29 [1] : vector<1x64xf32> to vector<1xf32>
    %76 = vector.shape_cast %75 : vector<1xf32> to vector<1x1xf32>
    %77 = vector.broadcast %9 : f32 to vector<1x1xf32>
    %78 = arith.addf %76, %77 : vector<1x1xf32>
    %79 = arith.mulf %73, %6 : vector<1x64xf32>
    %cst_30 = arith.constant dense<0.000000e+00> : vector<1xf32>
    %80 = vector.multi_reduction <add>, %79, %cst_30 [1] : vector<1x64xf32> to vector<1xf32>
    %81 = vector.shape_cast %80 : vector<1xf32> to vector<1x1xf32>
    %82 = vector.broadcast %10 : f32 to vector<1x1xf32>
    %83 = arith.addf %81, %82 : vector<1x1xf32>
    %84 = arith.addf %58, %78 : vector<1x1xf32>
    %85 = arith.addf %59, %83 : vector<1x1xf32>
    %86 = vector.extract_strided_slice %33 {offsets = [2, 0], sizes = [1, 64], strides = [1, 1]} : vector<8x64xf32> to vector<1x64xf32>
    %87 = vector.shape_cast %84 : vector<1x1xf32> to vector<1x1xf32>
    %88 = vector.broadcast %87 : vector<1x1xf32> to vector<1x8xf32>
    %c2_i32 = arith.constant 2 : i32
    %89 = arith.addi %26, %c2_i32 : i32
    %90 = arith.index_cast %89 : i32 to index
    %c0_31 = arith.constant 0 : index
    %91 = vector.load %arg7[%90, %c0_31] : memref<8x8xf32, #tpu.memory_space<vmem>>, vector<1x8xf32>
    tpu.vector_store %arg7[%90, %c0_31], %88 {strides = array<i32>} : memref<8x8xf32, #tpu.memory_space<vmem>>, vector<1x8xf32>,
    %92 = vector.broadcast %84 : vector<1x1xf32> to vector<1x64xf32>
    %93 = arith.mulf %92, %3 : vector<1x64xf32>
    %94 = vector.broadcast %85 : vector<1x1xf32> to vector<1x64xf32>
    %95 = arith.mulf %94, %4 : vector<1x64xf32>
    %96 = arith.addf %93, %95 : vector<1x64xf32>
    %97 = arith.addf %96, %86 : vector<1x64xf32>
    %cst_32 = arith.constant 0.000000e+00 : f32
    %98 = vector.broadcast %cst_32 : f32 to vector<1x64xf32>
    %99 = arith.maximumf %97, %98 : vector<1x64xf32>
    %100 = arith.mulf %99, %5 : vector<1x64xf32>
    %cst_33 = arith.constant dense<0.000000e+00> : vector<1xf32>
    %101 = vector.multi_reduction <add>, %100, %cst_33 [1] : vector<1x64xf32> to vector<1xf32>
    %102 = vector.shape_cast %101 : vector<1xf32> to vector<1x1xf32>
    %103 = vector.broadcast %9 : f32 to vector<1x1xf32>
    %104 = arith.addf %102, %103 : vector<1x1xf32>
    %105 = arith.mulf %99, %6 : vector<1x64xf32>
    %cst_34 = arith.constant dense<0.000000e+00> : vector<1xf32>
    %106 = vector.multi_reduction <add>, %105, %cst_34 [1] : vector<1x64xf32> to vector<1xf32>
    %107 = vector.shape_cast %106 : vector<1xf32> to vector<1x1xf32>
    %108 = vector.broadcast %10 : f32 to vector<1x1xf32>
    %109 = arith.addf %107, %108 : vector<1x1xf32>
    %110 = arith.addf %84, %104 : vector<1x1xf32>
    %111 = arith.addf %85, %109 : vector<1x1xf32>
    %112 = vector.extract_strided_slice %33 {offsets = [3, 0], sizes = [1, 64], strides = [1, 1]} : vector<8x64xf32> to vector<1x64xf32>
    %113 = vector.shape_cast %110 : vector<1x1xf32> to vector<1x1xf32>
    %114 = vector.broadcast %113 : vector<1x1xf32> to vector<1x8xf32>
    %c3_i32 = arith.constant 3 : i32
    %115 = arith.addi %26, %c3_i32 : i32
    %116 = arith.index_cast %115 : i32 to index
    %c0_35 = arith.constant 0 : index
    %117 = vector.load %arg7[%116, %c0_35] : memref<8x8xf32, #tpu.memory_space<vmem>>, vector<1x8xf32>
    tpu.vector_store %arg7[%116, %c0_35], %114 {strides = array<i32>} : memref<8x8xf32, #tpu.memory_space<vmem>>, vector<1x8xf32>,
    %118 = vector.broadcast %110 : vector<1x1xf32> to vector<1x64xf32>
    %119 = arith.mulf %118, %3 : vector<1x64xf32>
    %120 = vector.broadcast %111 : vector<1x1xf32> to vector<1x64xf32>
    %121 = arith.mulf %120, %4 : vector<1x64xf32>
    %122 = arith.addf %119, %121 : vector<1x64xf32>
    %123 = arith.addf %122, %112 : vector<1x64xf32>
    %cst_36 = arith.constant 0.000000e+00 : f32
    %124 = vector.broadcast %cst_36 : f32 to vector<1x64xf32>
    %125 = arith.maximumf %123, %124 : vector<1x64xf32>
    %126 = arith.mulf %125, %5 : vector<1x64xf32>
    %cst_37 = arith.constant dense<0.000000e+00> : vector<1xf32>
    %127 = vector.multi_reduction <add>, %126, %cst_37 [1] : vector<1x64xf32> to vector<1xf32>
    %128 = vector.shape_cast %127 : vector<1xf32> to vector<1x1xf32>
    %129 = vector.broadcast %9 : f32 to vector<1x1xf32>
    %130 = arith.addf %128, %129 : vector<1x1xf32>
    %131 = arith.mulf %125, %6 : vector<1x64xf32>
    %cst_38 = arith.constant dense<0.000000e+00> : vector<1xf32>
    %132 = vector.multi_reduction <add>, %131, %cst_38 [1] : vector<1x64xf32> to vector<1xf32>
    %133 = vector.shape_cast %132 : vector<1xf32> to vector<1x1xf32>
    %134 = vector.broadcast %10 : f32 to vector<1x1xf32>
    %135 = arith.addf %133, %134 : vector<1x1xf32>
    %136 = arith.addf %110, %130 : vector<1x1xf32>
    %137 = arith.addf %111, %135 : vector<1x1xf32>
    %138 = vector.extract_strided_slice %33 {offsets = [4, 0], sizes = [1, 64], strides = [1, 1]} : vector<8x64xf32> to vector<1x64xf32>
    %139 = vector.shape_cast %136 : vector<1x1xf32> to vector<1x1xf32>
    %140 = vector.broadcast %139 : vector<1x1xf32> to vector<1x8xf32>
    %c4_i32 = arith.constant 4 : i32
    %141 = arith.addi %26, %c4_i32 : i32
    %142 = arith.index_cast %141 : i32 to index
    %c0_39 = arith.constant 0 : index
    %143 = vector.load %arg7[%142, %c0_39] : memref<8x8xf32, #tpu.memory_space<vmem>>, vector<1x8xf32>
    tpu.vector_store %arg7[%142, %c0_39], %140 {strides = array<i32>} : memref<8x8xf32, #tpu.memory_space<vmem>>, vector<1x8xf32>,
    %144 = vector.broadcast %136 : vector<1x1xf32> to vector<1x64xf32>
    %145 = arith.mulf %144, %3 : vector<1x64xf32>
    %146 = vector.broadcast %137 : vector<1x1xf32> to vector<1x64xf32>
    %147 = arith.mulf %146, %4 : vector<1x64xf32>
    %148 = arith.addf %145, %147 : vector<1x64xf32>
    %149 = arith.addf %148, %138 : vector<1x64xf32>
    %cst_40 = arith.constant 0.000000e+00 : f32
    %150 = vector.broadcast %cst_40 : f32 to vector<1x64xf32>
    %151 = arith.maximumf %149, %150 : vector<1x64xf32>
    %152 = arith.mulf %151, %5 : vector<1x64xf32>
    %cst_41 = arith.constant dense<0.000000e+00> : vector<1xf32>
    %153 = vector.multi_reduction <add>, %152, %cst_41 [1] : vector<1x64xf32> to vector<1xf32>
    %154 = vector.shape_cast %153 : vector<1xf32> to vector<1x1xf32>
    %155 = vector.broadcast %9 : f32 to vector<1x1xf32>
    %156 = arith.addf %154, %155 : vector<1x1xf32>
    %157 = arith.mulf %151, %6 : vector<1x64xf32>
    %cst_42 = arith.constant dense<0.000000e+00> : vector<1xf32>
    %158 = vector.multi_reduction <add>, %157, %cst_42 [1] : vector<1x64xf32> to vector<1xf32>
    %159 = vector.shape_cast %158 : vector<1xf32> to vector<1x1xf32>
    %160 = vector.broadcast %10 : f32 to vector<1x1xf32>
    %161 = arith.addf %159, %160 : vector<1x1xf32>
    %162 = arith.addf %136, %156 : vector<1x1xf32>
    %163 = arith.addf %137, %161 : vector<1x1xf32>
    %164 = vector.extract_strided_slice %33 {offsets = [5, 0], sizes = [1, 64], strides = [1, 1]} : vector<8x64xf32> to vector<1x64xf32>
    %165 = vector.shape_cast %162 : vector<1x1xf32> to vector<1x1xf32>
    %166 = vector.broadcast %165 : vector<1x1xf32> to vector<1x8xf32>
    %c5_i32 = arith.constant 5 : i32
    %167 = arith.addi %26, %c5_i32 : i32
    %168 = arith.index_cast %167 : i32 to index
    %c0_43 = arith.constant 0 : index
    %169 = vector.load %arg7[%168, %c0_43] : memref<8x8xf32, #tpu.memory_space<vmem>>, vector<1x8xf32>
    tpu.vector_store %arg7[%168, %c0_43], %166 {strides = array<i32>} : memref<8x8xf32, #tpu.memory_space<vmem>>, vector<1x8xf32>,
    %170 = vector.broadcast %162 : vector<1x1xf32> to vector<1x64xf32>
    %171 = arith.mulf %170, %3 : vector<1x64xf32>
    %172 = vector.broadcast %163 : vector<1x1xf32> to vector<1x64xf32>
    %173 = arith.mulf %172, %4 : vector<1x64xf32>
    %174 = arith.addf %171, %173 : vector<1x64xf32>
    %175 = arith.addf %174, %164 : vector<1x64xf32>
    %cst_44 = arith.constant 0.000000e+00 : f32
    %176 = vector.broadcast %cst_44 : f32 to vector<1x64xf32>
    %177 = arith.maximumf %175, %176 : vector<1x64xf32>
    %178 = arith.mulf %177, %5 : vector<1x64xf32>
    %cst_45 = arith.constant dense<0.000000e+00> : vector<1xf32>
    %179 = vector.multi_reduction <add>, %178, %cst_45 [1] : vector<1x64xf32> to vector<1xf32>
    %180 = vector.shape_cast %179 : vector<1xf32> to vector<1x1xf32>
    %181 = vector.broadcast %9 : f32 to vector<1x1xf32>
    %182 = arith.addf %180, %181 : vector<1x1xf32>
    %183 = arith.mulf %177, %6 : vector<1x64xf32>
    %cst_46 = arith.constant dense<0.000000e+00> : vector<1xf32>
    %184 = vector.multi_reduction <add>, %183, %cst_46 [1] : vector<1x64xf32> to vector<1xf32>
    %185 = vector.shape_cast %184 : vector<1xf32> to vector<1x1xf32>
    %186 = vector.broadcast %10 : f32 to vector<1x1xf32>
    %187 = arith.addf %185, %186 : vector<1x1xf32>
    %188 = arith.addf %162, %182 : vector<1x1xf32>
    %189 = arith.addf %163, %187 : vector<1x1xf32>
    %190 = vector.extract_strided_slice %33 {offsets = [6, 0], sizes = [1, 64], strides = [1, 1]} : vector<8x64xf32> to vector<1x64xf32>
    %191 = vector.shape_cast %188 : vector<1x1xf32> to vector<1x1xf32>
    %192 = vector.broadcast %191 : vector<1x1xf32> to vector<1x8xf32>
    %c6_i32 = arith.constant 6 : i32
    %193 = arith.addi %26, %c6_i32 : i32
    %194 = arith.index_cast %193 : i32 to index
    %c0_47 = arith.constant 0 : index
    %195 = vector.load %arg7[%194, %c0_47] : memref<8x8xf32, #tpu.memory_space<vmem>>, vector<1x8xf32>
    tpu.vector_store %arg7[%194, %c0_47], %192 {strides = array<i32>} : memref<8x8xf32, #tpu.memory_space<vmem>>, vector<1x8xf32>,
    %196 = vector.broadcast %188 : vector<1x1xf32> to vector<1x64xf32>
    %197 = arith.mulf %196, %3 : vector<1x64xf32>
    %198 = vector.broadcast %189 : vector<1x1xf32> to vector<1x64xf32>
    %199 = arith.mulf %198, %4 : vector<1x64xf32>
    %200 = arith.addf %197, %199 : vector<1x64xf32>
    %201 = arith.addf %200, %190 : vector<1x64xf32>
    %cst_48 = arith.constant 0.000000e+00 : f32
    %202 = vector.broadcast %cst_48 : f32 to vector<1x64xf32>
    %203 = arith.maximumf %201, %202 : vector<1x64xf32>
    %204 = arith.mulf %203, %5 : vector<1x64xf32>
    %cst_49 = arith.constant dense<0.000000e+00> : vector<1xf32>
    %205 = vector.multi_reduction <add>, %204, %cst_49 [1] : vector<1x64xf32> to vector<1xf32>
    %206 = vector.shape_cast %205 : vector<1xf32> to vector<1x1xf32>
    %207 = vector.broadcast %9 : f32 to vector<1x1xf32>
    %208 = arith.addf %206, %207 : vector<1x1xf32>
    %209 = arith.mulf %203, %6 : vector<1x64xf32>
    %cst_50 = arith.constant dense<0.000000e+00> : vector<1xf32>
    %210 = vector.multi_reduction <add>, %209, %cst_50 [1] : vector<1x64xf32> to vector<1xf32>
    %211 = vector.shape_cast %210 : vector<1xf32> to vector<1x1xf32>
    %212 = vector.broadcast %10 : f32 to vector<1x1xf32>
    %213 = arith.addf %211, %212 : vector<1x1xf32>
    %214 = arith.addf %188, %208 : vector<1x1xf32>
    %215 = arith.addf %189, %213 : vector<1x1xf32>
    %216 = vector.extract_strided_slice %33 {offsets = [7, 0], sizes = [1, 64], strides = [1, 1]} : vector<8x64xf32> to vector<1x64xf32>
    %217 = vector.shape_cast %214 : vector<1x1xf32> to vector<1x1xf32>
    %218 = vector.broadcast %217 : vector<1x1xf32> to vector<1x8xf32>
    %c7_i32 = arith.constant 7 : i32
    %219 = arith.addi %26, %c7_i32 : i32
    %220 = arith.index_cast %219 : i32 to index
    %c0_51 = arith.constant 0 : index
    %221 = vector.load %arg7[%220, %c0_51] : memref<8x8xf32, #tpu.memory_space<vmem>>, vector<1x8xf32>
    tpu.vector_store %arg7[%220, %c0_51], %218 {strides = array<i32>} : memref<8x8xf32, #tpu.memory_space<vmem>>, vector<1x8xf32>,
    %222 = vector.broadcast %214 : vector<1x1xf32> to vector<1x64xf32>
    %223 = arith.mulf %222, %3 : vector<1x64xf32>
    %224 = vector.broadcast %215 : vector<1x1xf32> to vector<1x64xf32>
    %225 = arith.mulf %224, %4 : vector<1x64xf32>
    %226 = arith.addf %223, %225 : vector<1x64xf32>
    %227 = arith.addf %226, %216 : vector<1x64xf32>
    %cst_52 = arith.constant 0.000000e+00 : f32
    %228 = vector.broadcast %cst_52 : f32 to vector<1x64xf32>
    %229 = arith.maximumf %227, %228 : vector<1x64xf32>
    %230 = arith.mulf %229, %5 : vector<1x64xf32>
    %cst_53 = arith.constant dense<0.000000e+00> : vector<1xf32>
    %231 = vector.multi_reduction <add>, %230, %cst_53 [1] : vector<1x64xf32> to vector<1xf32>
    %232 = vector.shape_cast %231 : vector<1xf32> to vector<1x1xf32>
    %233 = vector.broadcast %9 : f32 to vector<1x1xf32>
    %234 = arith.addf %232, %233 : vector<1x1xf32>
    %235 = arith.mulf %229, %6 : vector<1x64xf32>
    %cst_54 = arith.constant dense<0.000000e+00> : vector<1xf32>
    %236 = vector.multi_reduction <add>, %235, %cst_54 [1] : vector<1x64xf32> to vector<1xf32>
    %237 = vector.shape_cast %236 : vector<1xf32> to vector<1x1xf32>
    %238 = vector.broadcast %10 : f32 to vector<1x1xf32>
    %239 = arith.addf %237, %238 : vector<1x1xf32>
    %240 = arith.addf %214, %234 : vector<1x1xf32>
    %241 = arith.addf %215, %239 : vector<1x1xf32>
    %c1_i32_55 = arith.constant 1 : i32
    %c0_i32_56 = arith.constant 0 : i32
    %242 = vector.broadcast %c0_i32_56 : i32 to vector<1x128xi32>
    %243 = arith.cmpi eq, %11, %242 : vector<1x128xi32>
    %cst_57 = arith.constant 0.000000e+00 : f32
    %244 = vector.shape_cast %240 : vector<1x1xf32> to vector<1x1xf32>
    %245 = vector.broadcast %244 : vector<1x1xf32> to vector<1x128xf32>
    %246 = vector.broadcast %cst_57 : f32 to vector<1x128xf32>
    %247 = arith.select %243, %245, %246 : vector<1x128xi1>, vector<1x128xf32>
    %c1_i32_58 = arith.constant 1 : i32
    %248 = vector.broadcast %c1_i32_58 : i32 to vector<1x128xi32>
    %249 = arith.cmpi eq, %11, %248 : vector<1x128xi32>
    %cst_59 = arith.constant 0.000000e+00 : f32
    %250 = vector.shape_cast %241 : vector<1x1xf32> to vector<1x1xf32>
    %251 = vector.broadcast %250 : vector<1x1xf32> to vector<1x128xf32>
    %252 = vector.broadcast %cst_59 : f32 to vector<1x128xf32>
    %253 = arith.select %249, %251, %252 : vector<1x128xi1>, vector<1x128xf32>
    %254 = arith.addf %247, %253 : vector<1x128xf32>
    %c0_60 = arith.constant 0 : index
    %c0_61 = arith.constant 0 : index
    %255 = vector.load %arg8[%c0_60, %c0_61] : memref<1x128xf32, #tpu.memory_space<vmem>>, vector<1x128xf32>
    tpu.vector_store %arg8[%c0_60, %c0_61], %254 {strides = array<i32>} : memref<1x128xf32, #tpu.memory_space<vmem>>, vector<1x128xf32>,
    return
  }
  func.func @transform_0(%arg0: i32) -> (i32, i32) {
    %c0_i32 = arith.constant 0 : i32
    %c0_i32_0 = arith.constant 0 : i32
    return %arg0, %c0_i32 : i32, i32
  }
  func.func @transform_1(%arg0: i32) -> (i32, i32) {
    %c0_i32 = arith.constant 0 : i32
    %c0_i32_0 = arith.constant 0 : i32
    %c0_i32_1 = arith.constant 0 : i32
    return %c0_i32, %c0_i32_0 : i32, i32
  }
  func.func @transform_2(%arg0: i32) -> (i32, i32) {
    %c0_i32 = arith.constant 0 : i32
    %c0_i32_0 = arith.constant 0 : i32
    %c0_i32_1 = arith.constant 0 : i32
    return %c0_i32, %c0_i32_0 : i32, i32
  }
  func.func @transform_3(%arg0: i32) -> (i32, i32) {
    %c0_i32 = arith.constant 0 : i32
    %c0_i32_0 = arith.constant 0 : i32
    %c0_i32_1 = arith.constant 0 : i32
    return %c0_i32, %c0_i32_0 : i32, i32
  }
  func.func @transform_4(%arg0: i32) -> (i32, i32) {
    %c0_i32 = arith.constant 0 : i32
    %c0_i32_0 = arith.constant 0 : i32
    %c0_i32_1 = arith.constant 0 : i32
    return %c0_i32, %c0_i32_0 : i32, i32
  }
  func.func @transform_5(%arg0: i32) -> i32 {
    %c0_i32 = arith.constant 0 : i32
    %c0_i32_0 = arith.constant 0 : i32
    return %c0_i32 : i32
  }
  func.func @transform_6(%arg0: i32) -> (i32, i32) {
    %c0_i32 = arith.constant 0 : i32
    %c0_i32_0 = arith.constant 0 : i32
    return %arg0, %c0_i32 : i32, i32
  }
}

</mosaic_0001>

<llo_original>
// kernel: state_space_wrapper_forward.1
$region0: #{state_space_wrapper_forward.1}
  #allocation0 [shape = 'u32[]', space=smem, size = 0x4, offset = 0x4, fixed_abs, tag = 'smem constant byte address 0x4 - core index']
  #allocation1 [shape = 'u32[144,128]{1,0:T(1,128)}', space=vmem, size = 0x12000, scoped, tag = 'internal scratch']
  #allocation2 [shape = 'f32[1,128]{1,0:T(1,128)}', space=vmem, size = 0x200, scoped, tag = 'scratch operand']
  %s0 = inlined_call_operand.vmem [shape: f32[8,1], index: 0, kind: input, shape index: {}]
  %s1 = inlined_call_operand.vmem [shape: f32[2,64], index: 1, kind: input, shape index: {}]
  %s2 = inlined_call_operand.vmem [shape: f32[2,64], index: 2, kind: input, shape index: {}]
  %s3 = inlined_call_operand.vmem [shape: f32[1,64], index: 3, kind: input, shape index: {}]
  %s4 = inlined_call_operand.vmem [shape: f32[1,64], index: 4, kind: input, shape index: {}]
  %s5 = inlined_call_operand.vmem [shape: f32[2], index: 5, kind: input, shape index: {}]
  %s6 = inlined_call_operand.vmem [shape: f32[8,8], index: 6, kind: output, shape index: {}]
  %s7 = sld [smem:[#allocation0]]
  $region42: #{state_space_wrapper_forward.1} parent=0
    _
  %s9 = ssub.s32 1, %s7
  %s10 = scalar_select 0, %s9, %s7
  $region1: #{state_space_wrapper_forward.1} parent=0
    #allocation3 [shape = 'u8[512]{0}', space=smem, size = 0x200, scoped, tag = 'input window, operand 5, single buffered']
    #allocation4 [shape = 's32[1]{0}', space=sflag, size = 0x4, scoped, tag = 'scoped memory for state_space_wrapper_forward.1']
    %11 = vsyncpa [#allocation4], 0
    // Predicated region
    $region2: #{state_space_wrapper_forward.1} parent=1 // pred_check
      _
    $region3: #{state_space_wrapper_forward.1} parent=1 // pred_check_branch
      %13 = sbr.rel (0) target = $region5
    $region4: #{state_space_wrapper_forward.1} parent=1 // pred_region
      _
    $region5: #{state_space_wrapper_forward.1} parent=1 // pred_fallthru
      _
    // Predicated region
    $region6: #{state_space_wrapper_forward.1} parent=1 // pred_check
      _
    $region7: #{state_space_wrapper_forward.1} parent=1 // pred_check_branch
      %15 = sbr.rel (0) target = $region9
    $region8: #{state_space_wrapper_forward.1} parent=1 // pred_region
      _
    $region9: #{state_space_wrapper_forward.1} parent=1 // pred_fallthru
      _
    // Predicated region
    $region10: #{state_space_wrapper_forward.1} parent=1 // pred_check
      _
    $region11: #{state_space_wrapper_forward.1} parent=1 // pred_check_branch
      %17 = sbr.rel (0) target = $region13
    $region12: #{state_space_wrapper_forward.1} parent=1 // pred_region
      _
    $region13: #{state_space_wrapper_forward.1} parent=1 // pred_fallthru
      _
    // Predicated region
    $region14: #{state_space_wrapper_forward.1} parent=1 // pred_check
      _
    $region15: #{state_space_wrapper_forward.1} parent=1 // pred_check_branch
      %19 = sbr.rel (0) target = $region17
    $region16: #{state_space_wrapper_forward.1} parent=1 // pred_region
      _
    $region17: #{state_space_wrapper_forward.1} parent=1 // pred_fallthru
      _
    // Predicated region
    $region18: #{state_space_wrapper_forward.1} parent=1 // pred_check
      _
    $region19: #{state_space_wrapper_forward.1} parent=1 // pred_check_branch
      %21 = sbr.rel (0) target = $region21
    $region20: #{state_space_wrapper_forward.1} parent=1 // pred_region
      _
    $region21: #{state_space_wrapper_forward.1} parent=1 // pred_fallthru
      _
    // Predicated region
    $region22: #{state_space_wrapper_forward.1} parent=1 // pred_check
      _
    $region23: #{state_space_wrapper_forward.1} parent=1 // pred_check_branch
      %23 = sbr.rel (0) target = $region25
    $region24: #{state_space_wrapper_forward.1} parent=1 // pred_region
      %s25 = ssub.s32 16, 16
      %26 = vsyncadd [#allocation4], %s25
      %s28 = sshll.u32 %s5, 4
      %s29 = int_to_ptr.vmem [resolvable:$true] %s28
      %31 = dma.vmem_to_smem %s29, 16, [#allocation3], [#allocation4]
    $region25: #{state_space_wrapper_forward.1} parent=1 // pred_fallthru
      _
    // Predicated region
    $region26: #{state_space_wrapper_forward.1} parent=1 // pred_check
      _
    $region27: #{state_space_wrapper_forward.1} parent=1 // pred_check_branch
      %33 = sbr.rel (0) target = $region29
    $region28: #{state_space_wrapper_forward.1} parent=1 // pred_region
      %34 = dma.done [#allocation4], 16
    $region29: #{state_space_wrapper_forward.1} parent=1 // pred_fallthru
      _
    %35 = sfence
    %p36 = scmp.eq.s32.totalorder 0, 0
    // Predicated region
    $region30: #{state_space_wrapper_forward.1} parent=1 // pred_check
      %p37 = pneg %p36
    $region31: #{state_space_wrapper_forward.1} parent=1 // pred_check_branch
      %39 = sbr.rel (%p37) target = $region33
    $region32: #{state_space_wrapper_forward.1} parent=1 // pred_region
      %40 = vst [vmem:[#allocation2] sm:$0x1] 0.0
    $region33: #{state_space_wrapper_forward.1} parent=1 // pred_fallthru
      _
    %v41 = vld [vmem:[%s1] sm:$0x1]
    %v42 = vld [vmem:[%s1 + $0x1] sm:$0x1]
    %v43 = vld [vmem:[%s2] sm:$0x1]
    %v44 = vld [vmem:[%s2 + $0x1] sm:$0x1]
    %v45 = vld [vmem:[%s3] sm:$0x1]
    %v46 = vld [vmem:[%s4] sm:$0x1]
    %s47 = sld [smem:[#allocation3]]
    %s48 = sld [smem:[#allocation3 + $0x1]]
    %v49 = vlaneseq
    %v50 = vand.u32 %v49, 127
    %v51 = vld [vmem:[#allocation2] sm:$0x1]
    %vm52 = vcmp.eq.s32.totalorder %v50, 0
    %v53 = vsel %vm52, %v51, 0.0
    %vm54 = vcmask 1040384
    %v55 = vsel %vm54, %v53, 0.0
    %56 = vadd.xlane.f32.xlu0 %v55
    %v57 = vpop.xlane.xlu0 %56
    %vm58 = vcmp.eq.s32.totalorder %v50, 1
    %v59 = vsel %vm58, %v51, 0.0
    %v60 = vsel %vm54, %v59, 0.0
    %61 = vadd.xlane.f32.xlu0 %v60
    %v62 = vpop.xlane.xlu0 %61
    %v63 = vld [vmem:[%s0] sm:$0xff]
    %65 = vset.pattern.permute.xlu0 0
    %66 = vperm.xlu0 %65, %v63
    %v67 = vpop.permute.xlu0 %66
    %v70 = vlaneseq
    %v71 = vshrl.u32 %v70, 7
    %v72 = vsub.s32 0, %v71
    %v73 = vrot.slane %v45, %v72
    %v75 = vmul.f32 %v67, %v73
    %v77 = vlaneseq
    %v78 = vshrl.u32 %v77, 7
    %v79 = vsub.s32 0, %v78
    %v80 = vrot.slane %v46, %v79
    %v82 = vadd.f32 %v75, %v80
    %vm83 = vcmask 57344
    %84 = vst.msk [vmem:[%s6] sm:$0x1] %vm83, %v57
    %v85 = vmul.f32 %v57, %v41
    %v86 = vmul.f32 %v62, %v42
    %v87 = vadd.f32 %v85, %v86
    %v88 = vadd.f32 %v87, %v82
    %v89 = vmax.f32 %v88, 0.0
    %v90 = vmul.f32 %v89, %v43
    %vm91 = vcmask 516096
    %v92 = vsel %vm91, %v90, 0.0
    %93 = vadd.xlane.f32.xlu0 %v92
    %v94 = vpop.xlane.xlu0 %93
    %v95 = vstv %s47
    %v96 = vadd.f32 %v94, %v95
    %v97 = vmul.f32 %v89, %v44
    %v98 = vsel %vm91, %v97, 0.0
    %99 = vadd.xlane.f32.xlu0 %v98
    %v100 = vpop.xlane.xlu0 %99
    %v101 = vstv %s48
    %v102 = vadd.f32 %v100, %v101
    %v103 = vadd.f32 %v57, %v96
    %v104 = vadd.f32 %v62, %v102
    %s105 = sadd.s32 0, 1
    %s106 = scalar_lea.vmem %s6, %s105
    %107 = vst.msk [vmem:[%s106] sm:$0x1] %vm83, %v103
    %v108 = vmul.f32 %v103, %v41
    %v109 = vmul.f32 %v104, %v42
    %v110 = vadd.f32 %v108, %v109
    %v112 = vrot.slane %v82, 1
    %v114 = vadd.f32 %v110, %v112
    %v115 = vmax.f32 %v114, 0.0
    %v116 = vmul.f32 %v115, %v43
    %v117 = vsel %vm91, %v116, 0.0
    %118 = vadd.xlane.f32.xlu0 %v117
    %v119 = vpop.xlane.xlu0 %118
    %v120 = vadd.f32 %v119, %v95
    %v121 = vmul.f32 %v115, %v44
    %v122 = vsel %vm91, %v121, 0.0
    %123 = vadd.xlane.f32.xlu0 %v122
    %v124 = vpop.xlane.xlu0 %123
    %v125 = vadd.f32 %v124, %v101
    %v126 = vadd.f32 %v103, %v120
    %v127 = vadd.f32 %v104, %v125
    %s128 = sadd.s32 0, 2
    %s129 = scalar_lea.vmem %s6, %s128
    %130 = vst.msk [vmem:[%s129] sm:$0x1] %vm83, %v126
    %v131 = vmul.f32 %v126, %v41
    %v132 = vmul.f32 %v127, %v42
    %v133 = vadd.f32 %v131, %v132
    %v134 = vrot.slane %v82, 2
    %v136 = vadd.f32 %v133, %v134
    %v137 = vmax.f32 %v136, 0.0
    %v138 = vmul.f32 %v137, %v43
    %v139 = vsel %vm91, %v138, 0.0
    %140 = vadd.xlane.f32.xlu0 %v139
    %v141 = vpop.xlane.xlu0 %140
    %v142 = vadd.f32 %v141, %v95
    %v143 = vmul.f32 %v137, %v44
    %v144 = vsel %vm91, %v143, 0.0
    %145 = vadd.xlane.f32.xlu0 %v144
    %v146 = vpop.xlane.xlu0 %145
    %v147 = vadd.f32 %v146, %v101
    %v148 = vadd.f32 %v126, %v142
    %v149 = vadd.f32 %v127, %v147
    %s150 = sadd.s32 0, 3
    %s151 = scalar_lea.vmem %s6, %s150
    %152 = vst.msk [vmem:[%s151] sm:$0x1] %vm83, %v148
    %v153 = vmul.f32 %v148, %v41
    %v154 = vmul.f32 %v149, %v42
    %v155 = vadd.f32 %v153, %v154
    %v156 = vrot.slane %v82, 3
    %v158 = vadd.f32 %v155, %v156
    %v159 = vmax.f32 %v158, 0.0
    %v160 = vmul.f32 %v159, %v43
    %v161 = vsel %vm91, %v160, 0.0
    %162 = vadd.xlane.f32.xlu0 %v161
    %v163 = vpop.xlane.xlu0 %162
    %v164 = vadd.f32 %v163, %v95
    %v165 = vmul.f32 %v159, %v44
    %v166 = vsel %vm91, %v165, 0.0
    %167 = vadd.xlane.f32.xlu0 %v166
    %v168 = vpop.xlane.xlu0 %167
    %v169 = vadd.f32 %v168, %v101
    %v170 = vadd.f32 %v148, %v164
    %v171 = vadd.f32 %v149, %v169
    %s172 = sadd.s32 0, 4
    %s173 = scalar_lea.vmem %s6, %s172
    %174 = vst.msk [vmem:[%s173] sm:$0x1] %vm83, %v170
    %v175 = vmul.f32 %v170, %v41
    %v176 = vmul.f32 %v171, %v42
    %v177 = vadd.f32 %v175, %v176
    %v178 = vrot.slane %v82, 4
    %v180 = vadd.f32 %v177, %v178
    %v181 = vmax.f32 %v180, 0.0
    %v182 = vmul.f32 %v181, %v43
    %v183 = vsel %vm91, %v182, 0.0
    %184 = vadd.xlane.f32.xlu0 %v183
    %v185 = vpop.xlane.xlu0 %184
    %v186 = vadd.f32 %v185, %v95
    %v187 = vmul.f32 %v181, %v44
    %v188 = vsel %vm91, %v187, 0.0
    %189 = vadd.xlane.f32.xlu0 %v188
    %v190 = vpop.xlane.xlu0 %189
    %v191 = vadd.f32 %v190, %v101
    %v192 = vadd.f32 %v170, %v186
    %v193 = vadd.f32 %v171, %v191
    %s194 = sadd.s32 0, 5
    %s195 = scalar_lea.vmem %s6, %s194
    %196 = vst.msk [vmem:[%s195] sm:$0x1] %vm83, %v192
    %v197 = vmul.f32 %v192, %v41
    %v198 = vmul.f32 %v193, %v42
    %v199 = vadd.f32 %v197, %v198
    %v200 = vrot.slane %v82, 5
    %v202 = vadd.f32 %v199, %v200
    %v203 = vmax.f32 %v202, 0.0
    %v204 = vmul.f32 %v203, %v43
    %v205 = vsel %vm91, %v204, 0.0
    %206 = vadd.xlane.f32.xlu0 %v205
    %v207 = vpop.xlane.xlu0 %206
    %v208 = vadd.f32 %v207, %v95
    %v209 = vmul.f32 %v203, %v44
    %v210 = vsel %vm91, %v209, 0.0
    %211 = vadd.xlane.f32.xlu0 %v210
    %v212 = vpop.xlane.xlu0 %211
    %v213 = vadd.f32 %v212, %v101
    %v214 = vadd.f32 %v192, %v208
    %v215 = vadd.f32 %v193, %v213
    %s216 = sadd.s32 0, 6
    %s217 = scalar_lea.vmem %s6, %s216
    %218 = vst.msk [vmem:[%s217] sm:$0x1] %vm83, %v214
    %v219 = vmul.f32 %v214, %v41
    %v220 = vmul.f32 %v215, %v42
    %v221 = vadd.f32 %v219, %v220
    %v222 = vrot.slane %v82, 6
    %v224 = vadd.f32 %v221, %v222
    %v225 = vmax.f32 %v224, 0.0
    %v226 = vmul.f32 %v225, %v43
    %v227 = vsel %vm91, %v226, 0.0
    %228 = vadd.xlane.f32.xlu0 %v227
    %v229 = vpop.xlane.xlu0 %228
    %v230 = vadd.f32 %v229, %v95
    %v231 = vmul.f32 %v225, %v44
    %v232 = vsel %vm91, %v231, 0.0
    %233 = vadd.xlane.f32.xlu0 %v232
    %v234 = vpop.xlane.xlu0 %233
    %v235 = vadd.f32 %v234, %v101
    %v236 = vadd.f32 %v214, %v230
    %v237 = vadd.f32 %v215, %v235
    %s238 = sadd.s32 0, 7
    %s239 = scalar_lea.vmem %s6, %s238
    %240 = vst.msk [vmem:[%s239] sm:$0x1] %vm83, %v236
    %v241 = vmul.f32 %v236, %v41
    %v242 = vmul.f32 %v237, %v42
    %v243 = vadd.f32 %v241, %v242
    %v244 = vrot.slane %v82, 7
    %v246 = vadd.f32 %v243, %v244
    %v247 = vmax.f32 %v246, 0.0
    %v248 = vmul.f32 %v247, %v43
    %v249 = vsel %vm91, %v248, 0.0
    %250 = vadd.xlane.f32.xlu0 %v249
    %v251 = vpop.xlane.xlu0 %250
    %v252 = vadd.f32 %v251, %v95
    %v253 = vmul.f32 %v247, %v44
    %v254 = vsel %vm91, %v253, 0.0
    %255 = vadd.xlane.f32.xlu0 %v254
    %v256 = vpop.xlane.xlu0 %255
    %v257 = vadd.f32 %v256, %v101
    %v258 = vadd.f32 %v236, %v252
    %v259 = vadd.f32 %v237, %v257
    %v260 = vsel %vm52, %v258, 0.0
    %v261 = vsel %vm58, %v259, 0.0
    %v262 = vadd.f32 %v260, %v261
    %263 = vst [vmem:[#allocation2] sm:$0x1] %v262
    // Predicated region
    $region34: #{state_space_wrapper_forward.1} parent=1 // pred_check
      _
    $region35: #{state_space_wrapper_forward.1} parent=1 // pred_check_branch
      %265 = sbr.rel (0) target = $region37
    $region36: #{state_space_wrapper_forward.1} parent=1 // pred_region
      _
    $region37: #{state_space_wrapper_forward.1} parent=1 // pred_fallthru
      _
    // Predicated region
    $region38: #{state_space_wrapper_forward.1} parent=1 // pred_check
      _
    $region39: #{state_space_wrapper_forward.1} parent=1 // pred_check_branch
      %267 = sbr.rel (0) target = $region41
    $region40: #{state_space_wrapper_forward.1} parent=1 // pred_region
      _
    $region41: #{state_space_wrapper_forward.1} parent=1 // pred_fallthru
      _
    %268 = vsyncpa [#allocation4], 1

</llo_original>
